<compile_context>
chip_gen: v7x
topology: tpu7x:2x2x1
jax: 0.10.0
libtpu: 0.0.40
codegen_flags: <defaults>
</compile_context>

<pallas_src>
import functools

import jax
import jax.numpy as jnp
from jax.experimental import pallas as pl
from jax.experimental.pallas import tpu as pltpu
from jax.scipy.special import digamma, gammaln, multigammaln


def _round_up(x, m):
    return (x + m - 1) // m * m


# ----------------------------------------------------------------------------
# natural <-> common parameter conversions (consistent pair, diagonal cov)
# ----------------------------------------------------------------------------
def common_to_natural(u, v, tau, c, n, B, D):
    nat_u = u - 1.0
    nat_v = v - 1.0
    nat_tau = c[:, None] * tau
    nat_c = c
    nat_n = n + D + 2.0
    nat_B = B + c[:, None] * tau ** 2
    return nat_u, nat_v, nat_tau, nat_c, nat_n, nat_B


def natural_to_common(nat_u, nat_v, nat_tau, nat_c, nat_n, nat_B, D):
    u = nat_u + 1.0
    v = nat_v + 1.0
    c = nat_c
    tau = nat_tau / c[:, None]
    n = nat_n - D - 2.0
    B = nat_B - c[:, None] * tau ** 2
    return u, v, tau, c, n, B


# ----------------------------------------------------------------------------
# Pallas kernel: responsibilities + per-tile logsumexp data-term partial
# ----------------------------------------------------------------------------
def _dpmm_estep_kernel(x_ref, a_ref, b_ref, bias_ref, r_ref, lse_ref, *,
                       n_rows, tn):
    # x is streamed bf16 (or f32); all math is f32.
    x = x_ref[...].astype(jnp.float32)                              # (tn, D)
    # quad_nk = sum_d x^2 * w_kd  - 2 sum_d x * tau_kd * w_kd       (MXU matmuls)
    quad = (jnp.dot(x * x, a_ref[...], preferred_element_type=jnp.float32)
            + jnp.dot(x, b_ref[...], preferred_element_type=jnp.float32))
    logits = bias_ref[...] - 0.5 * quad                             # (tn, K)

    # softmax over clusters (max-subtracted); exact divide (VALU has slack here)
    m = jnp.max(logits, axis=-1, keepdims=True)                     # (tn, 1)
    e = jnp.exp(logits - m)
    s = jnp.sum(e, axis=-1, keepdims=True)
    r_ref[...] = (e / s).astype(r_ref.dtype)

    # per-tile logsumexp partial; padded rows of the tail block hold stale
    # VMEM and MUST be masked before the reduction.
    rows_valid = n_rows - pl.program_id(0) * tn
    row_id = jax.lax.broadcasted_iota(jnp.int32, (tn, 1), 0)
    lse_rows = jnp.where(row_id < rows_valid, m + jnp.log(s), 0.0)
    part = jnp.sum(lse_rows)                                        # f32 scalar
    # splat into a lane-dense (1,8,128) block; wrapper reads [:, 0, 0]
    lse_ref[...] = jnp.broadcast_to(part, lse_ref.shape)


def dpmm_estep(x, A, Bm, bias, *, tn=None, x_dtype=jnp.bfloat16,
               r_dtype=jnp.float32):
    """Returns (r, sum_n logsumexp_k logits).  x: (N,D); A/Bm: (D,K); bias: (1,K)."""
    N, D = x.shape
    K = A.shape[1]

    # stream x as bf16 (dominant HBM read stream); no-op if already that dtype.
    if x_dtype is not None and x.dtype != x_dtype:
        x = x.astype(x_dtype)

    # Row tile: big enough to amortize the ~0.35 us/step pipeline overhead,
    # capped so large-N grids keep >= 8 steps (>= 4 per TensorCore on v7x),
    # and clamped to (8-padded) N so tiny inputs still work.
    if tn is None:
        tn = 8192
        if N >= 8 * 512:
            tn = min(tn, max(512, _round_up(-(-N // 8), 8)))
    tn = max(8, min(_round_up(tn, 8), _round_up(N, 8)))
    num_tiles = pl.cdiv(N, tn)

    # VMEM budget: double-buffered I/O blocks + resident params + in-kernel f32
    # intermediates (x, x*x, quad/logits/e, per-row vectors), 1.5x headroom,
    # capped well below v7x's 64 MiB physical / 32 MiB default scoped VMEM.
    x_bytes = jnp.dtype(x.dtype).itemsize
    r_bytes = jnp.dtype(r_dtype).itemsize
    io_bytes = (2 * tn * D * x_bytes + 2 * tn * K * r_bytes
                + 2 * 8 * 128 * 4 + 2 * (2 * D * K + K) * 4)
    interm_bytes = 4 * (2 * tn * D + 3 * tn * K + 4 * tn)
    vmem_limit = int(min(max(int(1.5 * (io_bytes + interm_bytes)),
                             16 * 1024 * 1024), 30 * 1024 * 1024))

    cost = pl.CostEstimate(
        flops=int(4 * N * D * K + 8 * N * K),
        transcendentals=int(N * K + N),
        bytes_accessed=int(N * D * x_bytes + N * K * r_bytes
                           + num_tiles * 8 * 128 * 4 + (2 * D * K + K) * 4))

    kernel = functools.partial(_dpmm_estep_kernel, n_rows=N, tn=tn)
    r, lse_parts = pl.pallas_call(
        kernel,
        out_shape=(jax.ShapeDtypeStruct((N, K), r_dtype),
                   jax.ShapeDtypeStruct((num_tiles, 8, 128), jnp.float32)),
        grid_spec=pltpu.PrefetchScalarGridSpec(
            num_scalar_prefetch=0,
            grid=(num_tiles,),
            in_specs=[
                # TODO(synk): on v5e, sweep pipeline_mode=pl.Buffered(3) on the
                # x spec (slower HBM, single vst slot).
                pl.BlockSpec((tn, D), lambda i: (i, 0)),   # x tile (bf16 stream)
                pl.BlockSpec((D, K), lambda i: (0, 0)),    # A  = E[Lambda]^T (resident)
                pl.BlockSpec((D, K), lambda i: (0, 0)),    # Bm = (-2*tau*E[Lambda])^T
                pl.BlockSpec((1, K), lambda i: (0, 0)),    # per-cluster bias
            ],
            out_specs=(
                pl.BlockSpec((tn, K), lambda i: (i, 0)),        # responsibilities
                pl.BlockSpec((1, 8, 128), lambda i: (i, 0, 0)), # lse partials
            ),
        ),
        compiler_params=pltpu.CompilerParams(
            # TODO(synk): on v7x, if profiling shows one TensorCore idle,
            # switch this axis to pltpu.CORE_PARALLEL.
            dimension_semantics=("parallel",),
            vmem_limit_bytes=vmem_limit),
        cost_estimate=cost,
    )(x, A, Bm, bias)
    return r, jnp.sum(lse_parts[:, 0, 0])


# ----------------------------------------------------------------------------
# glue: expected-statistics coefficients and KL terms (plain JAX, tiny O(K*D))
# ----------------------------------------------------------------------------
def _estep_coeffs(u, v, tau, c, n, B, D):
    # E[log pi_k] from stick-breaking Beta(u_k, v_k)
    dig_uv = digamma(u + v)
    e_log_stick = digamma(u) - dig_uv
    e_log_1m = digamma(v) - dig_uv
    e_log_pi = e_log_stick + jnp.cumsum(e_log_1m) - e_log_1m

    # E[log det Lambda_k]  (Wishart(n_k, B_k^{-1}), diagonal B)
    i = jnp.arange(1, D + 1, dtype=jnp.float32)
    e_logdet = (jnp.sum(digamma((n[:, None] + 1.0 - i[None, :]) / 2.0), axis=1)
                + D * jnp.log(2.0) - jnp.sum(jnp.log(B), axis=1))

    w = n[:, None] / B                                          # (K, D) = E[Lambda]_dd
    A = jnp.transpose(w)                                        # (D, K)
    Bm = jnp.transpose(-2.0 * tau * w)                          # (D, K)
    bias = (e_log_pi
            + 0.5 * e_logdet
            - 0.5 * D * jnp.log(2.0 * jnp.pi)
            - 0.5 * D / c
            - 0.5 * jnp.sum(tau ** 2 * w, axis=1))[None, :]     # (1, K)
    return A, Bm, bias


def _kl_beta(u, v, a0, b0):
    lbeta = lambda a, b: gammaln(a) + gammaln(b) - gammaln(a + b)
    return jnp.sum(lbeta(a0, b0) - lbeta(u, v)
                   + (u - a0) * digamma(u)
                   + (v - b0) * digamma(v)
                   + (a0 + b0 - u - v) * digamma(u + v))


def _kl_normal_wishart_diag(tau, c, n, B, tau0, c0, n0, B0, D):
    log2 = jnp.log(2.0)
    i = jnp.arange(1, D + 1, dtype=jnp.float32)
    e_logdet = (jnp.sum(digamma((n[:, None] + 1.0 - i[None, :]) / 2.0), axis=1)
                + D * log2 - jnp.sum(jnp.log(B), axis=1))
    e_maha = n * jnp.sum((tau - tau0) ** 2 / B, axis=1)
    kl_norm = 0.5 * (D * c0 / c + c0 * e_maha - D + D * jnp.log(c / c0))

    logdetV = -jnp.sum(jnp.log(B), axis=1)
    logdetV0 = -jnp.sum(jnp.log(B0), axis=1)
    tr_term = n * jnp.sum(B0 / B, axis=1)
    kl_wish = (0.5 * (n - n0) * e_logdet
               - 0.5 * n * D + 0.5 * tr_term
               - 0.5 * n * D * log2 - 0.5 * n * logdetV - multigammaln(n / 2.0, D)
               + 0.5 * n0 * D * log2 + 0.5 * n0 * logdetV0 + multigammaln(n0 / 2.0, D))
    return jnp.sum(kl_norm + kl_wish)


def gaussian_dpmm_forward(x, nat_params, prior, D, tn=None):
    """Returns (r, elbo_loss) like GaussianDPMM.forward (is_diagonal=True)."""
    alphaDP, tau0, c0, n0, B0 = prior
    u, v, tau, c, n, B = natural_to_common(*nat_params, D)
    A, Bm, bias = _estep_coeffs(u, v, tau, c, n, B, D)

    r, lse_sum = dpmm_estep(x, A, Bm, bias, tn=tn)

    kl_b = _kl_beta(u, v, jnp.ones_like(u), alphaDP * jnp.ones_like(v))
    kl_nw = _kl_normal_wishart_diag(tau, c, n, B, tau0, c0, n0, B0, D)
    elbo = lse_sum - kl_b - kl_nw
    return r, -elbo


# pure-JAX reference for the kernelized part (correctness check only)
def _estep_reference(x, A, Bm, bias):
    xf = x.astype(jnp.float32)
    hp = jax.lax.Precision.HIGHEST
    logits = bias - 0.5 * (jnp.dot(xf * xf, A, precision=hp)
                           + jnp.dot(xf, Bm, precision=hp))
    r = jax.nn.softmax(logits, axis=-1)
    lse = jnp.sum(jax.scipy.special.logsumexp(logits, axis=-1))
    return r, lse


if __name__ == "__main__":
    # small shapes consistent with the module: K clusters, D features, N points
    # (N not a multiple of the small test tile -> exercises the masked tail path)
    K, D, N = 16, 32, 200
    is_diagonal = True  # only the diagonal-covariance path is implemented
    # TODO(synk): full-covariance (is_diagonal=False) nat_B of shape (K, D, D)
    # is not implemented in the kernel.
    # TODO(synk): kmeans++ data-dependent init of init_var_params(x) is not
    # reproduced; deterministic init with small perturbations is used so the
    # correctness check is non-degenerate.

    key = jax.random.PRNGKey(0)
    kx, ku, kv, kc, kn, kt, kb = jax.random.split(key, 7)
    x = jax.random.normal(kx, (N, D), dtype=jnp.float32)

    # prior (constructor args), broadcast like __validate_arg__
    alphaDP = jnp.float32(1.0)
    tau0 = jnp.zeros((K, D), jnp.float32)
    c0 = jnp.ones((K,), jnp.float32)
    n0 = jnp.full((K,), float(D), jnp.float32)          # must be > D - 1
    B0 = jnp.ones((K, D), jnp.float32)

    # variational init (deterministic PRNG perturbations around the default init)
    u = 1.0 + jax.random.uniform(ku, (K,), jnp.float32)
    v = 1.0 + jax.random.uniform(kv, (K,), jnp.float32)
    c = 0.5 + jax.random.uniform(kc, (K,), jnp.float32)
    n = (D + 2.0) + 3.0 * jax.random.uniform(kn, (K,), jnp.float32)
    tau = 0.1 * jax.random.normal(kt, (K, D), jnp.float32)
    B = 2.0 + jax.random.uniform(kb, (K, D), jnp.float32)
    nat_params = common_to_natural(u, v, tau, c, n, B, D)

    # full forward with auto tile size (single block at this tiny N)
    fwd = jax.jit(functools.partial(gaussian_dpmm_forward, D=D))
    r, elbo_loss = fwd(x, nat_params, (alphaDP, tau0, c0, n0, B0))
    jax.block_until_ready((r, elbo_loss))

    # verify kernel against a pure-JAX reference of the same E-step, fed the
    # same bf16-cast x the wrapper streams (isolates kernel correctness from
    # the dtype policy).  Small tn -> multi-step grid + masked tail block.
    uc, vc, tc, cc, nc, Bc = natural_to_common(*nat_params, D)
    A_, Bm_, bias_ = _estep_coeffs(uc, vc, tc, cc, nc, Bc, D)
    x_stream = x.astype(jnp.bfloat16)
    r_ref, lse_ref = _estep_reference(x_stream, A_, Bm_, bias_)
    r_k, lse_k = dpmm_estep(x, A_, Bm_, bias_, tn=64)
    jax.block_until_ready((r_k, lse_k))

    assert r.shape == (N, K) and elbo_loss.shape == ()
    assert bool(jnp.isfinite(elbo_loss))
    assert bool(jnp.allclose(jnp.sum(r, axis=-1), 1.0, atol=1e-3))
    assert bool(jnp.allclose(r, r_ref, atol=5e-3, rtol=5e-3))
    assert bool(jnp.allclose(r_k, r_ref, atol=5e-3, rtol=5e-3))
    assert bool(jnp.allclose(lse_k, lse_ref, rtol=1e-4, atol=1.0))
    print("KERNEL_OK")
</pallas_src>

<mosaic_0001>
module attributes {stable_mosaic.version = 11 : i64} {
  func.func @_dpmm_estep_kernel(%arg0: i32, %arg1: memref<200x32xbf16, #tpu.memory_space<vmem>>, %arg2: memref<32x16xf32, #tpu.memory_space<vmem>>, %arg3: memref<32x16xf32, #tpu.memory_space<vmem>>, %arg4: memref<1x16xf32, #tpu.memory_space<vmem>>, %arg5: memref<200x16xf32, #tpu.memory_space<vmem>>, %arg6: memref<1x8x128xf32, #tpu.memory_space<vmem>>) attributes {dimension_semantics = [#tpu.dimension_semantics<parallel>], iteration_bounds = array<i64: 1>, scalar_prefetch = 0 : i64, scratch_operands = 0 : i64, tpu.core_type = #tpu.core_type<tc>, window_params = [{transform_indices = @transform_0, window_bounds = array<i64: 200, 32>}, {pipeline_mode = #tpu.pipeline_mode<synchronous>, transform_indices = @transform_1, window_bounds = array<i64: 32, 16>}, {pipeline_mode = #tpu.pipeline_mode<synchronous>, transform_indices = @transform_2, window_bounds = array<i64: 32, 16>}, {pipeline_mode = #tpu.pipeline_mode<synchronous>, transform_indices = @transform_3, window_bounds = array<i64: 1, 16>}, {transform_indices = @transform_4, window_bounds = array<i64: 200, 16>}, {transform_indices = @transform_5, window_bounds = array<i64: 1, 8, 128>}]} {
    %c0 = arith.constant 0 : index
    %c0_0 = arith.constant 0 : index
    %0 = vector.load %arg1[%c0, %c0_0] : memref<200x32xbf16, #tpu.memory_space<vmem>>, vector<200x32xbf16>
    %1 = arith.extf %0 : vector<200x32xbf16> to vector<200x32xf32>
    %2 = arith.mulf %1, %1 : vector<200x32xf32>
    %c0_1 = arith.constant 0 : index
    %c0_2 = arith.constant 0 : index
    %3 = vector.load %arg2[%c0_1, %c0_2] : memref<32x16xf32, #tpu.memory_space<vmem>>, vector<32x16xf32>
    %cst = arith.constant dense<0.000000e+00> : vector<200x16xf32>
    %4 = tpu.matmul %2, %3, %cst {dimension_numbers = #tpu.dot_dimension_numbers<[1], [0], [0], [1], [0, 0, 1, 1], [], []>} : vector<200x32xf32>, vector<32x16xf32>, vector<200x16xf32> -> vector<200x16xf32>
    %c0_3 = arith.constant 0 : index
    %c0_4 = arith.constant 0 : index
    %5 = vector.load %arg3[%c0_3, %c0_4] : memref<32x16xf32, #tpu.memory_space<vmem>>, vector<32x16xf32>
    %cst_5 = arith.constant dense<0.000000e+00> : vector<200x16xf32>
    %6 = tpu.matmul %1, %5, %cst_5 {dimension_numbers = #tpu.dot_dimension_numbers<[1], [0], [0], [1], [0, 0, 1, 1], [], []>} : vector<200x32xf32>, vector<32x16xf32>, vector<200x16xf32> -> vector<200x16xf32>
    %7 = arith.addf %4, %6 : vector<200x16xf32>
    %c0_6 = arith.constant 0 : index
    %c0_7 = arith.constant 0 : index
    %8 = vector.load %arg4[%c0_6, %c0_7] : memref<1x16xf32, #tpu.memory_space<vmem>>, vector<1x16xf32>
    %cst_8 = arith.constant 5.000000e-01 : f32
    %9 = vector.broadcast %cst_8 : f32 to vector<200x16xf32>
    %10 = arith.mulf %9, %7 : vector<200x16xf32>
    %11 = vector.broadcast %8 : vector<1x16xf32> to vector<200x16xf32>
    %12 = arith.subf %11, %10 : vector<200x16xf32>
    %cst_9 = arith.constant dense<0xFF800000> : vector<200xf32>
    %13 = vector.multi_reduction <maximumf>, %12, %cst_9 [1] : vector<200x16xf32> to vector<200xf32>
    %14 = vector.shape_cast %13 : vector<200xf32> to vector<200x1xf32>
    %15 = vector.broadcast %14 : vector<200x1xf32> to vector<200x16xf32>
    %16 = arith.subf %12, %15 : vector<200x16xf32>
    %17 = math.exp %16 : vector<200x16xf32>
    %cst_10 = arith.constant dense<0.000000e+00> : vector<200xf32>
    %18 = vector.multi_reduction <add>, %17, %cst_10 [1] : vector<200x16xf32> to vector<200xf32>
    %19 = vector.shape_cast %18 : vector<200xf32> to vector<200x1xf32>
    %20 = vector.broadcast %19 : vector<200x1xf32> to vector<200x16xf32>
    %21 = arith.divf %17, %20 : vector<200x16xf32>
    %c0_11 = arith.constant 0 : index
    %c0_12 = arith.constant 0 : index
    %22 = vector.load %arg5[%c0_11, %c0_12] : memref<200x16xf32, #tpu.memory_space<vmem>>, vector<200x16xf32>
    tpu.vector_store %arg5[%c0_11, %c0_12], %21 {strides = array<i32>} : memref<200x16xf32, #tpu.memory_space<vmem>>, vector<200x16xf32>,
    %c200_i32 = arith.constant 200 : i32
    %23 = arith.muli %arg0, %c200_i32 : i32
    %c200_i32_13 = arith.constant 200 : i32
    %24 = arith.subi %c200_i32_13, %23 : i32
    %25 = tpu.iota {dimensions = array<i32: 0>} : vector<200x1xi32>
    %26 = vector.broadcast %24 : i32 to vector<200x1xi32>
    %27 = arith.cmpi slt, %25, %26 : vector<200x1xi32>
    %28 = math.log %19 : vector<200x1xf32>
    %29 = arith.addf %14, %28 : vector<200x1xf32>
    %cst_14 = arith.constant 0.000000e+00 : f32
    %30 = vector.broadcast %cst_14 : f32 to vector<200x1xf32>
    %31 = arith.select %27, %29, %30 : vector<200x1xi1>, vector<200x1xf32>
    %32 = vector.shape_cast %31 : vector<200x1xf32> to vector<1x200x1xf32>
    %cst_15 = arith.constant dense<0.000000e+00> : vector<1xf32>
    %33 = vector.multi_reduction <add>, %32, %cst_15 [1, 2] : vector<1x200x1xf32> to vector<1xf32>
    %34 = vector.shape_cast %33 : vector<1xf32> to vector<1x1x1xf32>
    %35 = vector.extract %34[0, 0, 0] : f32 from vector<1x1x1xf32>
    %36 = vector.broadcast %35 : f32 to vector<1x8x128xf32>
    %c0_16 = arith.constant 0 : index
    %c0_17 = arith.constant 0 : index
    %c0_18 = arith.constant 0 : index
    %37 = vector.load %arg6[%c0_16, %c0_17, %c0_18] : memref<1x8x128xf32, #tpu.memory_space<vmem>>, vector<1x8x128xf32>
    tpu.vector_store %arg6[%c0_16, %c0_17, %c0_18], %36 {strides = array<i32>} : memref<1x8x128xf32, #tpu.memory_space<vmem>>, vector<1x8x128xf32>,
    return
  }
  func.func @transform_0(%arg0: i32) -> (i32, i32) {
    %c0_i32 = arith.constant 0 : i32
    %c0_i32_0 = arith.constant 0 : i32
    return %arg0, %c0_i32 : i32, i32
  }
  func.func @transform_1(%arg0: i32) -> (i32, i32) {
    %c0_i32 = arith.constant 0 : i32
    %c0_i32_0 = arith.constant 0 : i32
    %c0_i32_1 = arith.constant 0 : i32
    return %c0_i32, %c0_i32_0 : i32, i32
  }
  func.func @transform_2(%arg0: i32) -> (i32, i32) {
    %c0_i32 = arith.constant 0 : i32
    %c0_i32_0 = arith.constant 0 : i32
    %c0_i32_1 = arith.constant 0 : i32
    return %c0_i32, %c0_i32_0 : i32, i32
  }
  func.func @transform_3(%arg0: i32) -> (i32, i32) {
    %c0_i32 = arith.constant 0 : i32
    %c0_i32_0 = arith.constant 0 : i32
    %c0_i32_1 = arith.constant 0 : i32
    return %c0_i32, %c0_i32_0 : i32, i32
  }
  func.func @transform_4(%arg0: i32) -> (i32, i32) {
    %c0_i32 = arith.constant 0 : i32
    %c0_i32_0 = arith.constant 0 : i32
    return %arg0, %c0_i32 : i32, i32
  }
  func.func @transform_5(%arg0: i32) -> (i32, i32, i32) {
    %c0_i32 = arith.constant 0 : i32
    %c0_i32_0 = arith.constant 0 : i32
    %c0_i32_1 = arith.constant 0 : i32
    return %arg0, %c0_i32, %c0_i32_0 : i32, i32, i32
  }
}

</mosaic_0001>

<llo_original>
// kernel: sub.59
$region0: #{sub.59}
  #allocation0 [shape = 's32[1]{0}', space=sflag, size = 0x4, scoped, tag = 'scoped memory for sub.59']
  %s0 = inlined_call_operand.vmem [shape: f32[16], index: 0, kind: input, shape index: {}]
  %s1 = inlined_call_operand.vmem [shape: f32[16], index: 1, kind: input, shape index: {}]
  %s2 = inlined_call_operand.vmem [shape: f32[16], index: 2, kind: output, shape index: {}]
  %v3 = vld [vmem:[%s0] sm:$0x1]
  %v4 = vld [vmem:[%s1] sm:$0x1]
  %5 = xla_tuple %v3, %v4
  %6 = xla_tuple %5
  %v7 = vsub.f32 %v3, %v4
  %8 = xla_tuple %v7
  %9 = vst [vmem:[%s2] sm:$0x1] %v7

// kernel: gaussian_dpmm_forward.1
$region0: #{gaussian_dpmm_forward.1}
  #allocation0 [shape = 'u32[]', space=smem, size = 0x4, offset = 0x4, fixed_abs, tag = 'smem constant byte address 0x4 - core index']
  #allocation1 [shape = 'u32[144,128]{1,0:T(1,128)}', space=vmem, size = 0x12000, scoped, tag = 'internal scratch']
  %s0 = inlined_call_operand.vmem [shape: bf16[200,32], index: 0, kind: input, shape index: {}]
  %s1 = inlined_call_operand.vmem [shape: f32[32,16], index: 1, kind: input, shape index: {}]
  %s2 = inlined_call_operand.vmem [shape: f32[32,16], index: 2, kind: input, shape index: {}]
  %s3 = inlined_call_operand.vmem [shape: f32[1,16], index: 3, kind: input, shape index: {}]
  %s4 = inlined_call_operand.vmem [shape: f32[200,16], index: 4, kind: output, shape index: {0}]
  %s5 = inlined_call_operand.vmem [shape: f32[1,8,128], index: 5, kind: output, shape index: {1}]
  %6 = xla_tuple %s4, %s5
  %s7 = sld [smem:[#allocation0]]
  $region34: #{gaussian_dpmm_forward.1} parent=0
    _
  %s9 = ssub.s32 1, %s7
  %s10 = scalar_select 0, %s9, %s7
  // Predicated region
  $region2: #{gaussian_dpmm_forward.1} parent=0 // pred_check
    _
  $region3: #{gaussian_dpmm_forward.1} parent=0 // pred_check_branch
    %12 = sbr.rel (0) target = $region5
  $region4: #{gaussian_dpmm_forward.1} parent=0 // pred_region
    _
  $region5: #{gaussian_dpmm_forward.1} parent=0 // pred_fallthru
    _
  // Predicated region
  $region6: #{gaussian_dpmm_forward.1} parent=0 // pred_check
    _
  $region7: #{gaussian_dpmm_forward.1} parent=0 // pred_check_branch
    %14 = sbr.rel (0) target = $region9
  $region8: #{gaussian_dpmm_forward.1} parent=0 // pred_region
    _
  $region9: #{gaussian_dpmm_forward.1} parent=0 // pred_fallthru
    _
  // Predicated region
  $region10: #{gaussian_dpmm_forward.1} parent=0 // pred_check
    _
  $region11: #{gaussian_dpmm_forward.1} parent=0 // pred_check_branch
    %16 = sbr.rel (0) target = $region13
  $region12: #{gaussian_dpmm_forward.1} parent=0 // pred_region
    _
  $region13: #{gaussian_dpmm_forward.1} parent=0 // pred_fallthru
    _
  // Predicated region
  $region14: #{gaussian_dpmm_forward.1} parent=0 // pred_check
    _
  $region15: #{gaussian_dpmm_forward.1} parent=0 // pred_check_branch
    %18 = sbr.rel (0) target = $region17
  $region16: #{gaussian_dpmm_forward.1} parent=0 // pred_region
    _
  $region17: #{gaussian_dpmm_forward.1} parent=0 // pred_fallthru
    _
  %v19 = vld [vmem:[%s0] sm:$0xf]
  %v20 = vld [vmem:[%s0 + $0x4] sm:$0xf]
  %v21 = vld [vmem:[%s0 + $0x8] sm:$0xf]
  %v22 = vld [vmem:[%s0 + $0xc] sm:$0xf]
  %v23 = vld [vmem:[%s0 + $0x10] sm:$0xf]
  %v24 = vld [vmem:[%s0 + $0x14] sm:$0xf]
  %v25 = vld [vmem:[%s0 + $0x18] sm:$0xf]
  %v26 = vld [vmem:[%s0 + $0x1c] sm:$0xf]
  %v27 = vld [vmem:[%s0 + $0x20] sm:$0xf]
  %v28 = vld [vmem:[%s0 + $0x24] sm:$0xf]
  %v29 = vld [vmem:[%s0 + $0x28] sm:$0xf]
  %v30 = vld [vmem:[%s0 + $0x2c] sm:$0xf]
  %v31 = vld [vmem:[%s0 + $0x30] sm:$0xf]
  %v32 = vld [vmem:[%s0 + $0x34] sm:$0xf]
  %v33 = vld [vmem:[%s0 + $0x38] sm:$0xf]
  %v34 = vld [vmem:[%s0 + $0x3c] sm:$0xf]
  %v35 = vld [vmem:[%s0 + $0x40] sm:$0xf]
  %v36 = vld [vmem:[%s0 + $0x44] sm:$0xf]
  %v37 = vld [vmem:[%s0 + $0x48] sm:$0xf]
  %v38 = vld [vmem:[%s0 + $0x4c] sm:$0xf]
  %v39 = vld [vmem:[%s0 + $0x50] sm:$0xf]
  %v40 = vld [vmem:[%s0 + $0x54] sm:$0xf]
  %v41 = vld [vmem:[%s0 + $0x58] sm:$0xf]
  %v42 = vld [vmem:[%s0 + $0x5c] sm:$0xf]
  %v43 = vld [vmem:[%s0 + $0x60] sm:$0xf]
  %v44 = vunpack.c.l.bf16 %v19
  %v45 = vunpack.c.l.bf16 %v20
  %v46 = vunpack.c.l.bf16 %v21
  %v47 = vunpack.c.l.bf16 %v22
  %v48 = vunpack.c.l.bf16 %v23
  %v49 = vunpack.c.l.bf16 %v24
  %v50 = vunpack.c.l.bf16 %v25
  %v51 = vunpack.c.l.bf16 %v26
  %v52 = vunpack.c.l.bf16 %v27
  %v53 = vunpack.c.l.bf16 %v28
  %v54 = vunpack.c.l.bf16 %v29
  %v55 = vunpack.c.l.bf16 %v30
  %v56 = vunpack.c.l.bf16 %v31
  %v57 = vunpack.c.l.bf16 %v32
  %v58 = vunpack.c.l.bf16 %v33
  %v59 = vunpack.c.l.bf16 %v34
  %v60 = vunpack.c.l.bf16 %v35
  %v61 = vunpack.c.l.bf16 %v36
  %v62 = vunpack.c.l.bf16 %v37
  %v63 = vunpack.c.l.bf16 %v38
  %v64 = vunpack.c.l.bf16 %v39
  %v65 = vunpack.c.l.bf16 %v40
  %v66 = vunpack.c.l.bf16 %v41
  %v67 = vunpack.c.l.bf16 %v42
  %v68 = vunpack.c.l.bf16 %v43
  %v69 = vmul.f32 %v44, %v44
  %v70 = vmul.f32 %v45, %v45
  %v71 = vmul.f32 %v46, %v46
  %v72 = vmul.f32 %v47, %v47
  %v73 = vmul.f32 %v48, %v48
  %v74 = vmul.f32 %v49, %v49
  %v75 = vmul.f32 %v50, %v50
  %v76 = vmul.f32 %v51, %v51
  %v77 = vmul.f32 %v52, %v52
  %v78 = vmul.f32 %v53, %v53
  %v79 = vmul.f32 %v54, %v54
  %v80 = vmul.f32 %v55, %v55
  %v81 = vmul.f32 %v56, %v56
  %v82 = vmul.f32 %v57, %v57
  %v83 = vmul.f32 %v58, %v58
  %v84 = vmul.f32 %v59, %v59
  %v85 = vmul.f32 %v60, %v60
  %v86 = vmul.f32 %v61, %v61
  %v87 = vmul.f32 %v62, %v62
  %v88 = vmul.f32 %v63, %v63
  %v89 = vmul.f32 %v64, %v64
  %v90 = vmul.f32 %v65, %v65
  %v91 = vmul.f32 %v66, %v66
  %v92 = vmul.f32 %v67, %v67
  %v93 = vmul.f32 %v68, %v68
  %v94 = vld [vmem:[%s1] sm:$0xff]
  %v95 = vld [vmem:[%s1 + $0x8] sm:$0xff]
  %v96 = vld [vmem:[%s1 + $0x10] sm:$0xff]
  %v97 = vld [vmem:[%s1 + $0x18] sm:$0xff]
  %v98 = vld [vmem:[%s2] sm:$0xff]
  %v99 = vld [vmem:[%s2 + $0x8] sm:$0xff]
  %v100 = vld [vmem:[%s2 + $0x10] sm:$0xff]
  %v101 = vld [vmem:[%s2 + $0x18] sm:$0xff]
  %vm102 = vcmask 261120
  %v104 = vsel %vm102, %v44, 0
  %v107 = vsel %vm102, %v45, 0
  %v110 = vsel %vm102, %v46, 0
  %v113 = vsel %vm102, %v47, 0
  %v116 = vsel %vm102, %v48, 0
  %v119 = vsel %vm102, %v49, 0
  %v122 = vsel %vm102, %v50, 0
  %v125 = vsel %vm102, %v51, 0
  %v128 = vsel %vm102, %v52, 0
  %v131 = vsel %vm102, %v53, 0
  %v134 = vsel %vm102, %v54, 0
  %v137 = vsel %vm102, %v55, 0
  %v140 = vsel %vm102, %v56, 0
  %v143 = vsel %vm102, %v57, 0
  %v146 = vsel %vm102, %v58, 0
  %v149 = vsel %vm102, %v59, 0
  %v152 = vsel %vm102, %v60, 0
  %v155 = vsel %vm102, %v61, 0
  %v158 = vsel %vm102, %v62, 0
  %v161 = vsel %vm102, %v63, 0
  %v164 = vsel %vm102, %v64, 0
  %v167 = vsel %vm102, %v65, 0
  %v170 = vsel %vm102, %v66, 0
  %v173 = vsel %vm102, %v67, 0
  %v176 = vsel %vm102, %v68, 0
  %178 = vmatprep.subr.mxu0 0.0
  %179 = vmatpush1.msra.mxu0 %v98
  %180 = vmatprep.subr.mxu0 0.0
  %181 = vmatpush1.msra.mxu0 %v99
  %182 = vmatprep.subr.mxu0 0.0
  %183 = vmatpush1.msra.mxu0 %v100
  %184 = vmatprep.subr.mxu0 0.0
  %185 = vmatpush1.msra.mxu0 %v101
  %186 = vmatprep.subr.mxu0 0.0
  %187 = vmatpush1.msra.mxu0 0.0
  %188 = vmatprep.subr.mxu0 0.0
  %189 = vmatpush1.msra.mxu0 0.0
  %190 = vmatprep.subr.mxu0 0.0
  %191 = vmatpush1.msra.mxu0 0.0
  %192 = vmatprep.subr.mxu0 0.0
  %193 = vmatpush1.msra.mxu0 0.0
  %194 = vmatprep.subr.mxu0 0.0
  %195 = vmatpush1.msra.mxu0 0.0
  %196 = vmatprep.subr.mxu0 0.0
  %197 = vmatpush1.msra.mxu0 0.0
  %198 = vmatprep.subr.mxu0 0.0
  %199 = vmatpush1.msra.mxu0 0.0
  %200 = vmatprep.subr.mxu0 0.0
  %201 = vmatpush1.msra.mxu0 0.0
  %202 = vmatprep.subr.mxu0 0.0
  %203 = vmatpush1.msra.mxu0 0.0
  %204 = vmatprep.subr.mxu0 0.0
  %205 = vmatpush1.msra.mxu0 0.0
  %206 = vmatprep.subr.mxu0 0.0
  %207 = vmatpush1.msra.mxu0 0.0
  %208 = vmatprep.subr.mxu0 0.0
  %209 = vmatpush1.msra.mxu0 0.0
  %210 = vmatprep.subr.mxu0 0.0
  %211 = vmatpush1.msra.mxu0 0.0
  %212 = vmatprep.subr.mxu0 0.0
  %213 = vmatpush1.msra.mxu0 0.0
  %214 = vmatprep.subr.mxu0 0.0
  %215 = vmatpush1.msra.mxu0 0.0
  %216 = vmatprep.subr.mxu0 0.0
  %217 = vmatpush1.msra.mxu0 0.0
  %218 = vmatprep.subr.mxu0 0.0
  %219 = vmatpush1.msra.mxu0 0.0
  %220 = vmatprep.subr.mxu0 0.0
  %221 = vmatpush1.msra.mxu0 0.0
  %222 = vmatprep.subr.mxu0 0.0
  %223 = vmatpush1.msra.mxu0 0.0
  %224 = vmatprep.subr.mxu0 0.0
  %225 = vmatpush1.msra.mxu0 0.0
  %226 = vmatprep.subr.mxu0 0.0
  %227 = vmatpush1.msra.mxu0 0.0
  %228 = vmatprep.subr.mxu0 0.0
  %229 = vmatpush1.msra.mxu0 0.0
  %230 = vmatprep.subr.mxu0 0.0
  %231 = vmatpush1.msra.mxu0 0.0
  %232 = vmatprep.subr.mxu0 0.0
  %233 = vmatpush1.msra.mxu0 0.0
  %234 = vmatprep.subr.mxu0 0.0
  %235 = vmatpush1.msra.mxu0 0.0
  %236 = vmatprep.subr.mxu0 0.0
  %237 = vmatpush1.msra.mxu0 0.0
  %238 = vmatprep.subr.mxu0 0.0
  %239 = vmatpush1.msra.mxu0 0.0
  %240 = vmatprep.subr.mxu0 0.0
  %241 = vmatpush1.msra.mxu0 0.0
  %242 = vmatprep.mubr.f32.mxu0 0.0
  %243 = vmatmul.mubr.f32.gmra.mrb[0].mxu0 %v104
  %v244 = vpop.f32.mrb[0].mxu0
  %v245 = vadd.f32 0.0, %v244
  %v246 = vpop.f32.mrb[0].mxu0
  %247 = vmatprep.mubr.f32.mxu0 0.0
  %248 = vmatmul.mubr.f32.gmra.mrb[0].mxu0 %v107
  %v249 = vpop.f32.mrb[0].mxu0
  %v250 = vadd.f32 0.0, %v249
  %v251 = vpop.f32.mrb[0].mxu0
  %252 = vmatprep.mubr.f32.mxu0 0.0
  %253 = vmatmul.mubr.f32.gmra.mrb[0].mxu0 %v110
  %v254 = vpop.f32.mrb[0].mxu0
  %v255 = vadd.f32 0.0, %v254
  %v256 = vpop.f32.mrb[0].mxu0
  %257 = vmatprep.mubr.f32.mxu0 0.0
  %258 = vmatmul.mubr.f32.gmra.mrb[0].mxu0 %v113
  %v259 = vpop.f32.mrb[0].mxu0
  %v260 = vadd.f32 0.0, %v259
  %v261 = vpop.f32.mrb[0].mxu0
  %262 = vmatprep.mubr.f32.mxu0 0.0
  %263 = vmatmul.mubr.f32.gmra.mrb[0].mxu0 %v116
  %v264 = vpop.f32.mrb[0].mxu0
  %v265 = vadd.f32 0.0, %v264
  %v266 = vpop.f32.mrb[0].mxu0
  %267 = vmatprep.mubr.f32.mxu0 0.0
  %268 = vmatmul.mubr.f32.gmra.mrb[0].mxu0 %v119
  %v269 = vpop.f32.mrb[0].mxu0
  %v270 = vadd.f32 0.0, %v269
  %v271 = vpop.f32.mrb[0].mxu0
  %272 = vmatprep.mubr.f32.mxu0 0.0
  %273 = vmatmul.mubr.f32.gmra.mrb[0].mxu0 %v122
  %v274 = vpop.f32.mrb[0].mxu0
  %v275 = vadd.f32 0.0, %v274
  %v276 = vpop.f32.mrb[0].mxu0
  %277 = vmatprep.mubr.f32.mxu0 0.0
  %278 = vmatmul.mubr.f32.gmra.mrb[0].mxu0 %v125
  %v279 = vpop.f32.mrb[0].mxu0
  %v280 = vadd.f32 0.0, %v279
  %v281 = vpop.f32.mrb[0].mxu0
  %282 = vmatprep.mubr.f32.mxu0 0.0
  %283 = vmatmul.mubr.f32.gmra.mrb[0].mxu0 %v128
  %v284 = vpop.f32.mrb[0].mxu0
  %v285 = vadd.f32 0.0, %v284
  %v286 = vpop.f32.mrb[0].mxu0
  %287 = vmatprep.mubr.f32.mxu0 0.0
  %288 = vmatmul.mubr.f32.gmra.mrb[0].mxu0 %v131
  %v289 = vpop.f32.mrb[0].mxu0
  %v290 = vadd.f32 0.0, %v289
  %v291 = vpop.f32.mrb[0].mxu0
  %292 = vmatprep.mubr.f32.mxu0 0.0
  %293 = vmatmul.mubr.f32.gmra.mrb[0].mxu0 %v134
  %v294 = vpop.f32.mrb[0].mxu0
  %v295 = vadd.f32 0.0, %v294
  %v296 = vpop.f32.mrb[0].mxu0
  %297 = vmatprep.mubr.f32.mxu0 0.0
  %298 = vmatmul.mubr.f32.gmra.mrb[0].mxu0 %v137
  %v299 = vpop.f32.mrb[0].mxu0
  %v300 = vadd.f32 0.0, %v299
  %v301 = vpop.f32.mrb[0].mxu0
  %302 = vmatprep.mubr.f32.mxu0 0.0
  %303 = vmatmul.mubr.f32.gmra.mrb[0].mxu0 %v140
  %v304 = vpop.f32.mrb[0].mxu0
  %v305 = vadd.f32 0.0, %v304
  %v306 = vpop.f32.mrb[0].mxu0
  %307 = vmatprep.mubr.f32.mxu0 0.0
  %308 = vmatmul.mubr.f32.gmra.mrb[0].mxu0 %v143
  %v309 = vpop.f32.mrb[0].mxu0
  %v310 = vadd.f32 0.0, %v309
  %v311 = vpop.f32.mrb[0].mxu0
  %312 = vmatprep.mubr.f32.mxu0 0.0
  %313 = vmatmul.mubr.f32.gmra.mrb[0].mxu0 %v146
  %v314 = vpop.f32.mrb[0].mxu0
  %v315 = vadd.f32 0.0, %v314
  %v316 = vpop.f32.mrb[0].mxu0
  %317 = vmatprep.mubr.f32.mxu0 0.0
  %318 = vmatmul.mubr.f32.gmra.mrb[0].mxu0 %v149
  %v319 = vpop.f32.mrb[0].mxu0
  %v320 = vadd.f32 0.0, %v319
  %v321 = vpop.f32.mrb[0].mxu0
  %322 = vmatprep.mubr.f32.mxu0 0.0
  %323 = vmatmul.mubr.f32.gmra.mrb[0].mxu0 %v152
  %v324 = vpop.f32.mrb[0].mxu0
  %v325 = vadd.f32 0.0, %v324
  %v326 = vpop.f32.mrb[0].mxu0
  %327 = vmatprep.mubr.f32.mxu0 0.0
  %328 = vmatmul.mubr.f32.gmra.mrb[0].mxu0 %v155
  %v329 = vpop.f32.mrb[0].mxu0
  %v330 = vadd.f32 0.0, %v329
  %v331 = vpop.f32.mrb[0].mxu0
  %332 = vmatprep.mubr.f32.mxu0 0.0
  %333 = vmatmul.mubr.f32.gmra.mrb[0].mxu0 %v158
  %v334 = vpop.f32.mrb[0].mxu0
  %v335 = vadd.f32 0.0, %v334
  %v336 = vpop.f32.mrb[0].mxu0
  %337 = vmatprep.mubr.f32.mxu0 0.0
  %338 = vmatmul.mubr.f32.gmra.mrb[0].mxu0 %v161
  %v339 = vpop.f32.mrb[0].mxu0
  %v340 = vadd.f32 0.0, %v339
  %v341 = vpop.f32.mrb[0].mxu0
  %342 = vmatprep.mubr.f32.mxu0 0.0
  %343 = vmatmul.mubr.f32.gmra.mrb[0].mxu0 %v164
  %v344 = vpop.f32.mrb[0].mxu0
  %v345 = vadd.f32 0.0, %v344
  %v346 = vpop.f32.mrb[0].mxu0
  %347 = vmatprep.mubr.f32.mxu0 0.0
  %348 = vmatmul.mubr.f32.gmra.mrb[0].mxu0 %v167
  %v349 = vpop.f32.mrb[0].mxu0
  %v350 = vadd.f32 0.0, %v349
  %v351 = vpop.f32.mrb[0].mxu0
  %352 = vmatprep.mubr.f32.mxu0 0.0
  %353 = vmatmul.mubr.f32.gmra.mrb[0].mxu0 %v170
  %v354 = vpop.f32.mrb[0].mxu0
  %v355 = vadd.f32 0.0, %v354
  %v356 = vpop.f32.mrb[0].mxu0
  %357 = vmatprep.mubr.f32.mxu0 0.0
  %358 = vmatmul.mubr.f32.gmra.mrb[0].mxu0 %v173
  %v359 = vpop.f32.mrb[0].mxu0
  %v360 = vadd.f32 0.0, %v359
  %v361 = vpop.f32.mrb[0].mxu0
  %362 = vmatprep.mubr.f32.mxu0 0.0
  %363 = vmatmul.mubr.f32.gmra.mrb[0].mxu0 %v176
  %v364 = vpop.f32.mrb[0].mxu0
  %v365 = vadd.f32 0.0, %v364
  %v366 = vpop.f32.mrb[0].mxu0
  %367 = vdwg.mxu0
  %v369 = vsel %vm102, %v69, 0
  %v372 = vsel %vm102, %v70, 0
  %v375 = vsel %vm102, %v71, 0
  %v378 = vsel %vm102, %v72, 0
  %v381 = vsel %vm102, %v73, 0
  %v384 = vsel %vm102, %v74, 0
  %v387 = vsel %vm102, %v75, 0
  %v390 = vsel %vm102, %v76, 0
  %v393 = vsel %vm102, %v77, 0
  %v396 = vsel %vm102, %v78, 0
  %v399 = vsel %vm102, %v79, 0
  %v402 = vsel %vm102, %v80, 0
  %v405 = vsel %vm102, %v81, 0
  %v408 = vsel %vm102, %v82, 0
  %v411 = vsel %vm102, %v83, 0
  %v414 = vsel %vm102, %v84, 0
  %v417 = vsel %vm102, %v85, 0
  %v420 = vsel %vm102, %v86, 0
  %v423 = vsel %vm102, %v87, 0
  %v426 = vsel %vm102, %v88, 0
  %v429 = vsel %vm102, %v89, 0
  %v432 = vsel %vm102, %v90, 0
  %v435 = vsel %vm102, %v91, 0
  %v438 = vsel %vm102, %v92, 0
  %v441 = vsel %vm102, %v93, 0
  %443 = vmatprep.subr.mxu0 0.0
  %444 = vmatpush1.msra.mxu0 %v94
  %445 = vmatprep.subr.mxu0 0.0
  %446 = vmatpush1.msra.mxu0 %v95
  %447 = vmatprep.subr.mxu0 0.0
  %448 = vmatpush1.msra.mxu0 %v96
  %449 = vmatprep.subr.mxu0 0.0
  %450 = vmatpush1.msra.mxu0 %v97
  %451 = vmatprep.subr.mxu0 0.0
  %452 = vmatpush1.msra.mxu0 0.0
  %453 = vmatprep.subr.mxu0 0.0
  %454 = vmatpush1.msra.mxu0 0.0
  %455 = vmatprep.subr.mxu0 0.0
  %456 = vmatpush1.msra.mxu0 0.0
  %457 = vmatprep.subr.mxu0 0.0
  %458 = vmatpush1.msra.mxu0 0.0
  %459 = vmatprep.subr.mxu0 0.0
  %460 = vmatpush1.msra.mxu0 0.0
  %461 = vmatprep.subr.mxu0 0.0
  %462 = vmatpush1.msra.mxu0 0.0
  %463 = vmatprep.subr.mxu0 0.0
  %464 = vmatpush1.msra.mxu0 0.0
  %465 = vmatprep.subr.mxu0 0.0
  %466 = vmatpush1.msra.mxu0 0.0
  %467 = vmatprep.subr.mxu0 0.0
  %468 = vmatpush1.msra.mxu0 0.0
  %469 = vmatprep.subr.mxu0 0.0
  %470 = vmatpush1.msra.mxu0 0.0
  %471 = vmatprep.subr.mxu0 0.0
  %472 = vmatpush1.msra.mxu0 0.0
  %473 = vmatprep.subr.mxu0 0.0
  %474 = vmatpush1.msra.mxu0 0.0
  %475 = vmatprep.subr.mxu0 0.0
  %476 = vmatpush1.msra.mxu0 0.0
  %477 = vmatprep.subr.mxu0 0.0
  %478 = vmatpush1.msra.mxu0 0.0
  %479 = vmatprep.subr.mxu0 0.0
  %480 = vmatpush1.msra.mxu0 0.0
  %481 = vmatprep.subr.mxu0 0.0
  %482 = vmatpush1.msra.mxu0 0.0
  %483 = vmatprep.subr.mxu0 0.0
  %484 = vmatpush1.msra.mxu0 0.0
  %485 = vmatprep.subr.mxu0 0.0
  %486 = vmatpush1.msra.mxu0 0.0
  %487 = vmatprep.subr.mxu0 0.0
  %488 = vmatpush1.msra.mxu0 0.0
  %489 = vmatprep.subr.mxu0 0.0
  %490 = vmatpush1.msra.mxu0 0.0
  %491 = vmatprep.subr.mxu0 0.0
  %492 = vmatpush1.msra.mxu0 0.0
  %493 = vmatprep.subr.mxu0 0.0
  %494 = vmatpush1.msra.mxu0 0.0
  %495 = vmatprep.subr.mxu0 0.0
  %496 = vmatpush1.msra.mxu0 0.0
  %497 = vmatprep.subr.mxu0 0.0
  %498 = vmatpush1.msra.mxu0 0.0
  %499 = vmatprep.subr.mxu0 0.0
  %500 = vmatpush1.msra.mxu0 0.0
  %501 = vmatprep.subr.mxu0 0.0
  %502 = vmatpush1.msra.mxu0 0.0
  %503 = vmatprep.subr.mxu0 0.0
  %504 = vmatpush1.msra.mxu0 0.0
  %505 = vmatprep.subr.mxu0 0.0
  %506 = vmatpush1.msra.mxu0 0.0
  %507 = vmatprep.mubr.f32.mxu0 0.0
  %508 = vmatmul.mubr.f32.gmra.mrb[0].mxu0 %v369
  %v509 = vpop.f32.mrb[0].mxu0
  %v510 = vadd.f32 %v245, %v509
  %v511 = vpop.f32.mrb[0].mxu0
  %512 = vmatprep.mubr.f32.mxu0 0.0
  %513 = vmatmul.mubr.f32.gmra.mrb[0].mxu0 %v372
  %v514 = vpop.f32.mrb[0].mxu0
  %v515 = vadd.f32 %v250, %v514
  %v516 = vpop.f32.mrb[0].mxu0
  %517 = vmatprep.mubr.f32.mxu0 0.0
  %518 = vmatmul.mubr.f32.gmra.mrb[0].mxu0 %v375
  %v519 = vpop.f32.mrb[0].mxu0
  %v520 = vadd.f32 %v255, %v519
  %v521 = vpop.f32.mrb[0].mxu0
  %522 = vmatprep.mubr.f32.mxu0 0.0
  %523 = vmatmul.mubr.f32.gmra.mrb[0].mxu0 %v378
  %v524 = vpop.f32.mrb[0].mxu0
  %v525 = vadd.f32 %v260, %v524
  %v526 = vpop.f32.mrb[0].mxu0
  %527 = vmatprep.mubr.f32.mxu0 0.0
  %528 = vmatmul.mubr.f32.gmra.mrb[0].mxu0 %v381
  %v529 = vpop.f32.mrb[0].mxu0
  %v530 = vadd.f32 %v265, %v529
  %v531 = vpop.f32.mrb[0].mxu0
  %532 = vmatprep.mubr.f32.mxu0 0.0
  %533 = vmatmul.mubr.f32.gmra.mrb[0].mxu0 %v384
  %v534 = vpop.f32.mrb[0].mxu0
  %v535 = vadd.f32 %v270, %v534
  %v536 = vpop.f32.mrb[0].mxu0
  %537 = vmatprep.mubr.f32.mxu0 0.0
  %538 = vmatmul.mubr.f32.gmra.mrb[0].mxu0 %v387
  %v539 = vpop.f32.mrb[0].mxu0
  %v540 = vadd.f32 %v275, %v539
  %v541 = vpop.f32.mrb[0].mxu0
  %542 = vmatprep.mubr.f32.mxu0 0.0
  %543 = vmatmul.mubr.f32.gmra.mrb[0].mxu0 %v390
  %v544 = vpop.f32.mrb[0].mxu0
  %v545 = vadd.f32 %v280, %v544
  %v546 = vpop.f32.mrb[0].mxu0
  %547 = vmatprep.mubr.f32.mxu0 0.0
  %548 = vmatmul.mubr.f32.gmra.mrb[0].mxu0 %v393
  %v549 = vpop.f32.mrb[0].mxu0
  %v550 = vadd.f32 %v285, %v549
  %v551 = vpop.f32.mrb[0].mxu0
  %552 = vmatprep.mubr.f32.mxu0 0.0
  %553 = vmatmul.mubr.f32.gmra.mrb[0].mxu0 %v396
  %v554 = vpop.f32.mrb[0].mxu0
  %v555 = vadd.f32 %v290, %v554
  %v556 = vpop.f32.mrb[0].mxu0
  %557 = vmatprep.mubr.f32.mxu0 0.0
  %558 = vmatmul.mubr.f32.gmra.mrb[0].mxu0 %v399
  %v559 = vpop.f32.mrb[0].mxu0
  %v560 = vadd.f32 %v295, %v559
  %v561 = vpop.f32.mrb[0].mxu0
  %562 = vmatprep.mubr.f32.mxu0 0.0
  %563 = vmatmul.mubr.f32.gmra.mrb[0].mxu0 %v402
  %v564 = vpop.f32.mrb[0].mxu0
  %v565 = vadd.f32 %v300, %v564
  %v566 = vpop.f32.mrb[0].mxu0
  %567 = vmatprep.mubr.f32.mxu0 0.0
  %568 = vmatmul.mubr.f32.gmra.mrb[0].mxu0 %v405
  %v569 = vpop.f32.mrb[0].mxu0
  %v570 = vadd.f32 %v305, %v569
  %v571 = vpop.f32.mrb[0].mxu0
  %572 = vmatprep.mubr.f32.mxu0 0.0
  %573 = vmatmul.mubr.f32.gmra.mrb[0].mxu0 %v408
  %v574 = vpop.f32.mrb[0].mxu0
  %v575 = vadd.f32 %v310, %v574
  %v576 = vpop.f32.mrb[0].mxu0
  %577 = vmatprep.mubr.f32.mxu0 0.0
  %578 = vmatmul.mubr.f32.gmra.mrb[0].mxu0 %v411
  %v579 = vpop.f32.mrb[0].mxu0
  %v580 = vadd.f32 %v315, %v579
  %v581 = vpop.f32.mrb[0].mxu0
  %582 = vmatprep.mubr.f32.mxu0 0.0
  %583 = vmatmul.mubr.f32.gmra.mrb[0].mxu0 %v414
  %v584 = vpop.f32.mrb[0].mxu0
  %v585 = vadd.f32 %v320, %v584
  %v586 = vpop.f32.mrb[0].mxu0
  %587 = vmatprep.mubr.f32.mxu0 0.0
  %588 = vmatmul.mubr.f32.gmra.mrb[0].mxu0 %v417
  %v589 = vpop.f32.mrb[0].mxu0
  %v590 = vadd.f32 %v325, %v589
  %v591 = vpop.f32.mrb[0].mxu0
  %592 = vmatprep.mubr.f32.mxu0 0.0
  %593 = vmatmul.mubr.f32.gmra.mrb[0].mxu0 %v420
  %v594 = vpop.f32.mrb[0].mxu0
  %v595 = vadd.f32 %v330, %v594
  %v596 = vpop.f32.mrb[0].mxu0
  %597 = vmatprep.mubr.f32.mxu0 0.0
  %598 = vmatmul.mubr.f32.gmra.mrb[0].mxu0 %v423
  %v599 = vpop.f32.mrb[0].mxu0
  %v600 = vadd.f32 %v335, %v599
  %v601 = vpop.f32.mrb[0].mxu0
  %602 = vmatprep.mubr.f32.mxu0 0.0
  %603 = vmatmul.mubr.f32.gmra.mrb[0].mxu0 %v426
  %v604 = vpop.f32.mrb[0].mxu0
  %v605 = vadd.f32 %v340, %v604
  %v606 = vpop.f32.mrb[0].mxu0
  %607 = vmatprep.mubr.f32.mxu0 0.0
  %608 = vmatmul.mubr.f32.gmra.mrb[0].mxu0 %v429
  %v609 = vpop.f32.mrb[0].mxu0
  %v610 = vadd.f32 %v345, %v609
  %v611 = vpop.f32.mrb[0].mxu0
  %612 = vmatprep.mubr.f32.mxu0 0.0
  %613 = vmatmul.mubr.f32.gmra.mrb[0].mxu0 %v432
  %v614 = vpop.f32.mrb[0].mxu0
  %v615 = vadd.f32 %v350, %v614
  %v616 = vpop.f32.mrb[0].mxu0
  %617 = vmatprep.mubr.f32.mxu0 0.0
  %618 = vmatmul.mubr.f32.gmra.mrb[0].mxu0 %v435
  %v619 = vpop.f32.mrb[0].mxu0
  %v620 = vadd.f32 %v355, %v619
  %v621 = vpop.f32.mrb[0].mxu0
  %622 = vmatprep.mubr.f32.mxu0 0.0
  %623 = vmatmul.mubr.f32.gmra.mrb[0].mxu0 %v438
  %v624 = vpop.f32.mrb[0].mxu0
  %v625 = vadd.f32 %v360, %v624
  %v626 = vpop.f32.mrb[0].mxu0
  %627 = vmatprep.mubr.f32.mxu0 0.0
  %628 = vmatmul.mubr.f32.gmra.mrb[0].mxu0 %v441
  %v629 = vpop.f32.mrb[0].mxu0
  %v630 = vadd.f32 %v365, %v629
  %v631 = vpop.f32.mrb[0].mxu0
  %632 = vdwg.mxu0
  %v633 = vld [vmem:[%s3] sm:$0x1]
  %v634 = vmul.f32 %v510, 0.5
  %v635 = vmul.f32 %v515, 0.5
  %v636 = vmul.f32 %v520, 0.5
  %v637 = vmul.f32 %v525, 0.5
  %v638 = vmul.f32 %v530, 0.5
  %v639 = vmul.f32 %v535, 0.5
  %v640 = vmul.f32 %v540, 0.5
  %v641 = vmul.f32 %v545, 0.5
  %v642 = vmul.f32 %v550, 0.5
  %v643 = vmul.f32 %v555, 0.5
  %v644 = vmul.f32 %v560, 0.5
  %v645 = vmul.f32 %v565, 0.5
  %v646 = vmul.f32 %v570, 0.5
  %v647 = vmul.f32 %v575, 0.5
  %v648 = vmul.f32 %v580, 0.5
  %v649 = vmul.f32 %v585, 0.5
  %v650 = vmul.f32 %v590, 0.5
  %v651 = vmul.f32 %v595, 0.5
  %v652 = vmul.f32 %v600, 0.5
  %v653 = vmul.f32 %v605, 0.5
  %v654 = vmul.f32 %v610, 0.5
  %v655 = vmul.f32 %v615, 0.5
  %v656 = vmul.f32 %v620, 0.5
  %v657 = vmul.f32 %v625, 0.5
  %v658 = vmul.f32 %v630, 0.5
  %v660 = vlaneseq
  %v661 = vshrl.u32 %v660, 7
  %v662 = vsub.s32 0, %v661
  %v663 = vrot.slane %v633, %v662
  %v665 = vsub.f32 %v663, %v634
  %v666 = vsub.f32 %v663, %v635
  %v667 = vsub.f32 %v663, %v636
  %v668 = vsub.f32 %v663, %v637
  %v669 = vsub.f32 %v663, %v638
  %v670 = vsub.f32 %v663, %v639
  %v671 = vsub.f32 %v663, %v640
  %v672 = vsub.f32 %v663, %v641
  %v673 = vsub.f32 %v663, %v642
  %v674 = vsub.f32 %v663, %v643
  %v675 = vsub.f32 %v663, %v644
  %v676 = vsub.f32 %v663, %v645
  %v677 = vsub.f32 %v663, %v646
  %v678 = vsub.f32 %v663, %v647
  %v679 = vsub.f32 %v663, %v648
  %v680 = vsub.f32 %v663, %v649
  %v681 = vsub.f32 %v663, %v650
  %v682 = vsub.f32 %v663, %v651
  %v683 = vsub.f32 %v663, %v652
  %v684 = vsub.f32 %v663, %v653
  %v685 = vsub.f32 %v663, %v654
  %v686 = vsub.f32 %v663, %v655
  %v687 = vsub.f32 %v663, %v656
  %v688 = vsub.f32 %v663, %v657
  %v689 = vsub.f32 %v663, %v658
  %vm690 = vcmask 130048
  %v691 = vsel %vm690, %v665, -inf
  %692 = vmax.xlane.f32.xlu0 %v691
  %v693 = vpop.xlane.xlu0 %692
  %v694 = vsel %vm690, %v666, -inf
  %695 = vmax.xlane.f32.xlu0 %v694
  %v696 = vpop.xlane.xlu0 %695
  %v697 = vsel %vm690, %v667, -inf
  %698 = vmax.xlane.f32.xlu0 %v697
  %v699 = vpop.xlane.xlu0 %698
  %v700 = vsel %vm690, %v668, -inf
  %701 = vmax.xlane.f32.xlu0 %v700
  %v702 = vpop.xlane.xlu0 %701
  %v703 = vsel %vm690, %v669, -inf
  %704 = vmax.xlane.f32.xlu0 %v703
  %v705 = vpop.xlane.xlu0 %704
  %v706 = vsel %vm690, %v670, -inf
  %707 = vmax.xlane.f32.xlu0 %v706
  %v708 = vpop.xlane.xlu0 %707
  %v709 = vsel %vm690, %v671, -inf
  %710 = vmax.xlane.f32.xlu0 %v709
  %v711 = vpop.xlane.xlu0 %710
  %v712 = vsel %vm690, %v672, -inf
  %713 = vmax.xlane.f32.xlu0 %v712
  %v714 = vpop.xlane.xlu0 %713
  %v715 = vsel %vm690, %v673, -inf
  %716 = vmax.xlane.f32.xlu0 %v715
  %v717 = vpop.xlane.xlu0 %716
  %v718 = vsel %vm690, %v674, -inf
  %719 = vmax.xlane.f32.xlu0 %v718
  %v720 = vpop.xlane.xlu0 %719
  %v721 = vsel %vm690, %v675, -inf
  %722 = vmax.xlane.f32.xlu0 %v721
  %v723 = vpop.xlane.xlu0 %722
  %v724 = vsel %vm690, %v676, -inf
  %725 = vmax.xlane.f32.xlu0 %v724
  %v726 = vpop.xlane.xlu0 %725
  %v727 = vsel %vm690, %v677, -inf
  %728 = vmax.xlane.f32.xlu0 %v727
  %v729 = vpop.xlane.xlu0 %728
  %v730 = vsel %vm690, %v678, -inf
  %731 = vmax.xlane.f32.xlu0 %v730
  %v732 = vpop.xlane.xlu0 %731
  %v733 = vsel %vm690, %v679, -inf
  %734 = vmax.xlane.f32.xlu0 %v733
  %v735 = vpop.xlane.xlu0 %734
  %v736 = vsel %vm690, %v680, -inf
  %737 = vmax.xlane.f32.xlu0 %v736
  %v738 = vpop.xlane.xlu0 %737
  %v739 = vsel %vm690, %v681, -inf
  %740 = vmax.xlane.f32.xlu0 %v739
  %v741 = vpop.xlane.xlu0 %740
  %v742 = vsel %vm690, %v682, -inf
  %743 = vmax.xlane.f32.xlu0 %v742
  %v744 = vpop.xlane.xlu0 %743
  %v745 = vsel %vm690, %v683, -inf
  %746 = vmax.xlane.f32.xlu0 %v745
  %v747 = vpop.xlane.xlu0 %746
  %v748 = vsel %vm690, %v684, -inf
  %749 = vmax.xlane.f32.xlu0 %v748
  %v750 = vpop.xlane.xlu0 %749
  %v751 = vsel %vm690, %v685, -inf
  %752 = vmax.xlane.f32.xlu0 %v751
  %v753 = vpop.xlane.xlu0 %752
  %v754 = vsel %vm690, %v686, -inf
  %755 = vmax.xlane.f32.xlu0 %v754
  %v756 = vpop.xlane.xlu0 %755
  %v757 = vsel %vm690, %v687, -inf
  %758 = vmax.xlane.f32.xlu0 %v757
  %v759 = vpop.xlane.xlu0 %758
  %v760 = vsel %vm690, %v688, -inf
  %761 = vmax.xlane.f32.xlu0 %v760
  %v762 = vpop.xlane.xlu0 %761
  %v763 = vsel %vm690, %v689, -inf
  %764 = vmax.xlane.f32.xlu0 %v763
  %v765 = vpop.xlane.xlu0 %764
  %v766 = vsub.f32 %v665, %v693
  %v767 = vsub.f32 %v666, %v696
  %v768 = vsub.f32 %v667, %v699
  %v769 = vsub.f32 %v668, %v702
  %v770 = vsub.f32 %v669, %v705
  %v771 = vsub.f32 %v670, %v708
  %v772 = vsub.f32 %v671, %v711
  %v773 = vsub.f32 %v672, %v714
  %v774 = vsub.f32 %v673, %v717
  %v775 = vsub.f32 %v674, %v720
  %v776 = vsub.f32 %v675, %v723
  %v777 = vsub.f32 %v676, %v726
  %v778 = vsub.f32 %v677, %v729
  %v779 = vsub.f32 %v678, %v732
  %v780 = vsub.f32 %v679, %v735
  %v781 = vsub.f32 %v680, %v738
  %v782 = vsub.f32 %v681, %v741
  %v783 = vsub.f32 %v682, %v744
  %v784 = vsub.f32 %v683, %v747
  %v785 = vsub.f32 %v684, %v750
  %v786 = vsub.f32 %v685, %v753
  %v787 = vsub.f32 %v686, %v756
  %v788 = vsub.f32 %v687, %v759
  %v789 = vsub.f32 %v688, %v762
  %v790 = vsub.f32 %v689, %v765
  %v791 = vmul.f32 %v766, 1.442695
  %v792 = vpow.pop %v791
  %v793 = vmul.f32 %v767, 1.442695
  %v794 = vpow.pop %v793
  %v795 = vmul.f32 %v768, 1.442695
  %v796 = vpow.pop %v795
  %v797 = vmul.f32 %v769, 1.442695
  %v798 = vpow.pop %v797
  %v799 = vmul.f32 %v770, 1.442695
  %v800 = vpow.pop %v799
  %v801 = vmul.f32 %v771, 1.442695
  %v802 = vpow.pop %v801
  %v803 = vmul.f32 %v772, 1.442695
  %v804 = vpow.pop %v803
  %v805 = vmul.f32 %v773, 1.442695
  %v806 = vpow.pop %v805
  %v807 = vmul.f32 %v774, 1.442695
  %v808 = vpow.pop %v807
  %v809 = vmul.f32 %v775, 1.442695
  %v810 = vpow.pop %v809
  %v811 = vmul.f32 %v776, 1.442695
  %v812 = vpow.pop %v811
  %v813 = vmul.f32 %v777, 1.442695
  %v814 = vpow.pop %v813
  %v815 = vmul.f32 %v778, 1.442695
  %v816 = vpow.pop %v815
  %v817 = vmul.f32 %v779, 1.442695
  %v818 = vpow.pop %v817
  %v819 = vmul.f32 %v780, 1.442695
  %v820 = vpow.pop %v819
  %v821 = vmul.f32 %v781, 1.442695
  %v822 = vpow.pop %v821
  %v823 = vmul.f32 %v782, 1.442695
  %v824 = vpow.pop %v823
  %v825 = vmul.f32 %v783, 1.442695
  %v826 = vpow.pop %v825
  %v827 = vmul.f32 %v784, 1.442695
  %v828 = vpow.pop %v827
  %v829 = vmul.f32 %v785, 1.442695
  %v830 = vpow.pop %v829
  %v831 = vmul.f32 %v786, 1.442695
  %v832 = vpow.pop %v831
  %v833 = vmul.f32 %v787, 1.442695
  %v834 = vpow.pop %v833
  %v835 = vmul.f32 %v788, 1.442695
  %v836 = vpow.pop %v835
  %v837 = vmul.f32 %v789, 1.442695
  %v838 = vpow.pop %v837
  %v839 = vmul.f32 %v790, 1.442695
  %v840 = vpow.pop %v839
  %v841 = vsel %vm690, %v792, 0.0
  %842 = vadd.xlane.f32.xlu0 %v841
  %v843 = vpop.xlane.xlu0 %842
  %v844 = vsel %vm690, %v794, 0.0
  %845 = vadd.xlane.f32.xlu0 %v844
  %v846 = vpop.xlane.xlu0 %845
  %v847 = vsel %vm690, %v796, 0.0
  %848 = vadd.xlane.f32.xlu0 %v847
  %v849 = vpop.xlane.xlu0 %848
  %v850 = vsel %vm690, %v798, 0.0
  %851 = vadd.xlane.f32.xlu0 %v850
  %v852 = vpop.xlane.xlu0 %851
  %v853 = vsel %vm690, %v800, 0.0
  %854 = vadd.xlane.f32.xlu0 %v853
  %v855 = vpop.xlane.xlu0 %854
  %v856 = vsel %vm690, %v802, 0.0
  %857 = vadd.xlane.f32.xlu0 %v856
  %v858 = vpop.xlane.xlu0 %857
  %v859 = vsel %vm690, %v804, 0.0
  %860 = vadd.xlane.f32.xlu0 %v859
  %v861 = vpop.xlane.xlu0 %860
  %v862 = vsel %vm690, %v806, 0.0
  %863 = vadd.xlane.f32.xlu0 %v862
  %v864 = vpop.xlane.xlu0 %863
  %v865 = vsel %vm690, %v808, 0.0
  %866 = vadd.xlane.f32.xlu0 %v865
  %v867 = vpop.xlane.xlu0 %866
  %v868 = vsel %vm690, %v810, 0.0
  %869 = vadd.xlane.f32.xlu0 %v868
  %v870 = vpop.xlane.xlu0 %869
  %v871 = vsel %vm690, %v812, 0.0
  %872 = vadd.xlane.f32.xlu0 %v871
  %v873 = vpop.xlane.xlu0 %872
  %v874 = vsel %vm690, %v814, 0.0
  %875 = vadd.xlane.f32.xlu0 %v874
  %v876 = vpop.xlane.xlu0 %875
  %v877 = vsel %vm690, %v816, 0.0
  %878 = vadd.xlane.f32.xlu0 %v877
  %v879 = vpop.xlane.xlu0 %878
  %v880 = vsel %vm690, %v818, 0.0
  %881 = vadd.xlane.f32.xlu0 %v880
  %v882 = vpop.xlane.xlu0 %881
  %v883 = vsel %vm690, %v820, 0.0
  %884 = vadd.xlane.f32.xlu0 %v883
  %v885 = vpop.xlane.xlu0 %884
  %v886 = vsel %vm690, %v822, 0.0
  %887 = vadd.xlane.f32.xlu0 %v886
  %v888 = vpop.xlane.xlu0 %887
  %v889 = vsel %vm690, %v824, 0.0
  %890 = vadd.xlane.f32.xlu0 %v889
  %v891 = vpop.xlane.xlu0 %890
  %v892 = vsel %vm690, %v826, 0.0
  %893 = vadd.xlane.f32.xlu0 %v892
  %v894 = vpop.xlane.xlu0 %893
  %v895 = vsel %vm690, %v828, 0.0
  %896 = vadd.xlane.f32.xlu0 %v895
  %v897 = vpop.xlane.xlu0 %896
  %v898 = vsel %vm690, %v830, 0.0
  %899 = vadd.xlane.f32.xlu0 %v898
  %v900 = vpop.xlane.xlu0 %899
  %v901 = vsel %vm690, %v832, 0.0
  %902 = vadd.xlane.f32.xlu0 %v901
  %v903 = vpop.xlane.xlu0 %902
  %v904 = vsel %vm690, %v834, 0.0
  %905 = vadd.xlane.f32.xlu0 %v904
  %v906 = vpop.xlane.xlu0 %905
  %v907 = vsel %vm690, %v836, 0.0
  %908 = vadd.xlane.f32.xlu0 %v907
  %v909 = vpop.xlane.xlu0 %908
  %v910 = vsel %vm690, %v838, 0.0
  %911 = vadd.xlane.f32.xlu0 %v910
  %v912 = vpop.xlane.xlu0 %911
  %v913 = vsel %vm690, %v840, 0.0
  %914 = vadd.xlane.f32.xlu0 %v913
  %v915 = vpop.xlane.xlu0 %914
  %v916 = vrcp.pop %v843
  %v917 = vmul.f32 %v792, %v916
  %v918 = vrcp.pop %v846
  %v919 = vmul.f32 %v794, %v918
  %v920 = vrcp.pop %v849
  %v921 = vmul.f32 %v796, %v920
  %v922 = vrcp.pop %v852
  %v923 = vmul.f32 %v798, %v922
  %v924 = vrcp.pop %v855
  %v925 = vmul.f32 %v800, %v924
  %v926 = vrcp.pop %v858
  %v927 = vmul.f32 %v802, %v926
  %v928 = vrcp.pop %v861
  %v929 = vmul.f32 %v804, %v928
  %v930 = vrcp.pop %v864
  %v931 = vmul.f32 %v806, %v930
  %v932 = vrcp.pop %v867
  %v933 = vmul.f32 %v808, %v932
  %v934 = vrcp.pop %v870
  %v935 = vmul.f32 %v810, %v934
  %v936 = vrcp.pop %v873
  %v937 = vmul.f32 %v812, %v936
  %v938 = vrcp.pop %v876
  %v939 = vmul.f32 %v814, %v938
  %v940 = vrcp.pop %v879
  %v941 = vmul.f32 %v816, %v940
  %v942 = vrcp.pop %v882
  %v943 = vmul.f32 %v818, %v942
  %v944 = vrcp.pop %v885
  %v945 = vmul.f32 %v820, %v944
  %v946 = vrcp.pop %v888
  %v947 = vmul.f32 %v822, %v946
  %v948 = vrcp.pop %v891
  %v949 = vmul.f32 %v824, %v948
  %v950 = vrcp.pop %v894
  %v951 = vmul.f32 %v826, %v950
  %v952 = vrcp.pop %v897
  %v953 = vmul.f32 %v828, %v952
  %v954 = vrcp.pop %v900
  %v955 = vmul.f32 %v830, %v954
  %v956 = vrcp.pop %v903
  %v957 = vmul.f32 %v832, %v956
  %v958 = vrcp.pop %v906
  %v959 = vmul.f32 %v834, %v958
  %v960 = vrcp.pop %v909
  %v961 = vmul.f32 %v836, %v960
  %v962 = vrcp.pop %v912
  %v963 = vmul.f32 %v838, %v962
  %v964 = vrcp.pop %v915
  %v965 = vmul.f32 %v840, %v964
  %966 = vst.msk [vmem:[%s4] sm:$0xff] %vm690, %v917
  %967 = vst.msk [vmem:[%s4 + $0x8] sm:$0xff] %vm690, %v919
  %968 = vst.msk [vmem:[%s4 + $0x10] sm:$0xff] %vm690, %v921
  %969 = vst.msk [vmem:[%s4 + $0x18] sm:$0xff] %vm690, %v923
  %970 = vst.msk [vmem:[%s4 + $0x20] sm:$0xff] %vm690, %v925
  %971 = vst.msk [vmem:[%s4 + $0x28] sm:$0xff] %vm690, %v927
  %972 = vst.msk [vmem:[%s4 + $0x30] sm:$0xff] %vm690, %v929
  %973 = vst.msk [vmem:[%s4 + $0x38] sm:$0xff] %vm690, %v931
  %974 = vst.msk [vmem:[%s4 + $0x40] sm:$0xff] %vm690, %v933
  %975 = vst.msk [vmem:[%s4 + $0x48] sm:$0xff] %vm690, %v935
  %976 = vst.msk [vmem:[%s4 + $0x50] sm:$0xff] %vm690, %v937
  %977 = vst.msk [vmem:[%s4 + $0x58] sm:$0xff] %vm690, %v939
  %978 = vst.msk [vmem:[%s4 + $0x60] sm:$0xff] %vm690, %v941
  %979 = vst.msk [vmem:[%s4 + $0x68] sm:$0xff] %vm690, %v943
  %980 = vst.msk [vmem:[%s4 + $0x70] sm:$0xff] %vm690, %v945
  %981 = vst.msk [vmem:[%s4 + $0x78] sm:$0xff] %vm690, %v947
  %982 = vst.msk [vmem:[%s4 + $0x80] sm:$0xff] %vm690, %v949
  %983 = vst.msk [vmem:[%s4 + $0x88] sm:$0xff] %vm690, %v951
  %984 = vst.msk [vmem:[%s4 + $0x90] sm:$0xff] %vm690, %v953
  %985 = vst.msk [vmem:[%s4 + $0x98] sm:$0xff] %vm690, %v955
  %986 = vst.msk [vmem:[%s4 + $0xa0] sm:$0xff] %vm690, %v957
  %987 = vst.msk [vmem:[%s4 + $0xa8] sm:$0xff] %vm690, %v959
  %988 = vst.msk [vmem:[%s4 + $0xb0] sm:$0xff] %vm690, %v961
  %989 = vst.msk [vmem:[%s4 + $0xb8] sm:$0xff] %vm690, %v963
  %990 = vst.msk [vmem:[%s4 + $0xc0] sm:$0xff] %vm690, %v965
  %s991 = smul.u32 0, 200
  %s992 = ssub.s32 200, %s991
  %v993 = vlaneseq
  %v994 = vshrl.u32 %v993, 7
  %v995 = vadd.s32 %v994, 8
  %v996 = vadd.s32 %v994, 16
  %v997 = vadd.s32 %v994, 24
  %v998 = vadd.s32 %v994, 32
  %v999 = vadd.s32 %v994, 40
  %v1000 = vadd.s32 %v994, 48
  %v1001 = vadd.s32 %v994, 56
  %v1002 = vadd.s32 %v994, 64
  %v1003 = vadd.s32 %v994, 72
  %v1004 = vadd.s32 %v994, 80
  %v1005 = vadd.s32 %v994, 88
  %v1006 = vadd.s32 %v994, 96
  %v1007 = vadd.s32 %v994, 104
  %v1008 = vadd.s32 %v994, 112
  %v1009 = vadd.s32 %v994, 120
  %v1010 = vadd.s32 %v994, 128
  %v1011 = vadd.s32 %v994, 136
  %v1012 = vadd.s32 %v994, 144
  %v1013 = vadd.s32 %v994, 152
  %v1014 = vadd.s32 %v994, 160
  %v1015 = vadd.s32 %v994, 168
  %v1016 = vadd.s32 %v994, 176
  %v1017 = vadd.s32 %v994, 184
  %v1018 = vadd.s32 %v994, 192
  %v1019 = vstv %s992
  %vm1020 = vcmp.lt.s32.totalorder %v994, %v1019
  %vm1021 = vcmp.lt.s32.totalorder %v995, %v1019
  %vm1022 = vcmp.lt.s32.totalorder %v996, %v1019
  %vm1023 = vcmp.lt.s32.totalorder %v997, %v1019
  %vm1024 = vcmp.lt.s32.totalorder %v998, %v1019
  %vm1025 = vcmp.lt.s32.totalorder %v999, %v1019
  %vm1026 = vcmp.lt.s32.totalorder %v1000, %v1019
  %vm1027 = vcmp.lt.s32.totalorder %v1001, %v1019
  %vm1028 = vcmp.lt.s32.totalorder %v1002, %v1019
  %vm1029 = vcmp.lt.s32.totalorder %v1003, %v1019
  %vm1030 = vcmp.lt.s32.totalorder %v1004, %v1019
  %vm1031 = vcmp.lt.s32.totalorder %v1005, %v1019
  %vm1032 = vcmp.lt.s32.totalorder %v1006, %v1019
  %vm1033 = vcmp.lt.s32.totalorder %v1007, %v1019
  %vm1034 = vcmp.lt.s32.totalorder %v1008, %v1019
  %vm1035 = vcmp.lt.s32.totalorder %v1009, %v1019
  %vm1036 = vcmp.lt.s32.totalorder %v1010, %v1019
  %vm1037 = vcmp.lt.s32.totalorder %v1011, %v1019
  %vm1038 = vcmp.lt.s32.totalorder %v1012, %v1019
  %vm1039 = vcmp.lt.s32.totalorder %v1013, %v1019
  %vm1040 = vcmp.lt.s32.totalorder %v1014, %v1019
  %vm1041 = vcmp.lt.s32.totalorder %v1015, %v1019
  %vm1042 = vcmp.lt.s32.totalorder %v1016, %v1019
  %vm1043 = vcmp.lt.s32.totalorder %v1017, %v1019
  %vm1044 = vcmp.lt.s32.totalorder %v1018, %v1019
  %v1045 = vlog2.pop %v843
  %v1046 = vmul.f32 %v1045, 0.6931472
  %v1047 = vlog2.pop %v846
  %v1048 = vmul.f32 %v1047, 0.6931472
  %v1049 = vlog2.pop %v849
  %v1050 = vmul.f32 %v1049, 0.6931472
  %v1051 = vlog2.pop %v852
  %v1052 = vmul.f32 %v1051, 0.6931472
  %v1053 = vlog2.pop %v855
  %v1054 = vmul.f32 %v1053, 0.6931472
  %v1055 = vlog2.pop %v858
  %v1056 = vmul.f32 %v1055, 0.6931472
  %v1057 = vlog2.pop %v861
  %v1058 = vmul.f32 %v1057, 0.6931472
  %v1059 = vlog2.pop %v864
  %v1060 = vmul.f32 %v1059, 0.6931472
  %v1061 = vlog2.pop %v867
  %v1062 = vmul.f32 %v1061, 0.6931472
  %v1063 = vlog2.pop %v870
  %v1064 = vmul.f32 %v1063, 0.6931472
  %v1065 = vlog2.pop %v873
  %v1066 = vmul.f32 %v1065, 0.6931472
  %v1067 = vlog2.pop %v876
  %v1068 = vmul.f32 %v1067, 0.6931472
  %v1069 = vlog2.pop %v879
  %v1070 = vmul.f32 %v1069, 0.6931472
  %v1071 = vlog2.pop %v882
  %v1072 = vmul.f32 %v1071, 0.6931472
  %v1073 = vlog2.pop %v885
  %v1074 = vmul.f32 %v1073, 0.6931472
  %v1075 = vlog2.pop %v888
  %v1076 = vmul.f32 %v1075, 0.6931472
  %v1077 = vlog2.pop %v891
  %v1078 = vmul.f32 %v1077, 0.6931472
  %v1079 = vlog2.pop %v894
  %v1080 = vmul.f32 %v1079, 0.6931472
  %v1081 = vlog2.pop %v897
  %v1082 = vmul.f32 %v1081, 0.6931472
  %v1083 = vlog2.pop %v900
  %v1084 = vmul.f32 %v1083, 0.6931472
  %v1085 = vlog2.pop %v903
  %v1086 = vmul.f32 %v1085, 0.6931472
  %v1087 = vlog2.pop %v906
  %v1088 = vmul.f32 %v1087, 0.6931472
  %v1089 = vlog2.pop %v909
  %v1090 = vmul.f32 %v1089, 0.6931472
  %v1091 = vlog2.pop %v912
  %v1092 = vmul.f32 %v1091, 0.6931472
  %v1093 = vlog2.pop %v915
  %v1094 = vmul.f32 %v1093, 0.6931472
  %v1095 = vadd.f32 %v693, %v1046
  %v1096 = vadd.f32 %v696, %v1048
  %v1097 = vadd.f32 %v699, %v1050
  %v1098 = vadd.f32 %v702, %v1052
  %v1099 = vadd.f32 %v705, %v1054
  %v1100 = vadd.f32 %v708, %v1056
  %v1101 = vadd.f32 %v711, %v1058
  %v1102 = vadd.f32 %v714, %v1060
  %v1103 = vadd.f32 %v717, %v1062
  %v1104 = vadd.f32 %v720, %v1064
  %v1105 = vadd.f32 %v723, %v1066
  %v1106 = vadd.f32 %v726, %v1068
  %v1107 = vadd.f32 %v729, %v1070
  %v1108 = vadd.f32 %v732, %v1072
  %v1109 = vadd.f32 %v735, %v1074
  %v1110 = vadd.f32 %v738, %v1076
  %v1111 = vadd.f32 %v741, %v1078
  %v1112 = vadd.f32 %v744, %v1080
  %v1113 = vadd.f32 %v747, %v1082
  %v1114 = vadd.f32 %v750, %v1084
  %v1115 = vadd.f32 %v753, %v1086
  %v1116 = vadd.f32 %v756, %v1088
  %v1117 = vadd.f32 %v759, %v1090
  %v1118 = vadd.f32 %v762, %v1092
  %v1119 = vadd.f32 %v765, %v1094
  %v1120 = vsel %vm1020, %v1095, 0.0
  %v1121 = vsel %vm1021, %v1096, 0.0
  %v1122 = vsel %vm1022, %v1097, 0.0
  %v1123 = vsel %vm1023, %v1098, 0.0
  %v1124 = vsel %vm1024, %v1099, 0.0
  %v1125 = vsel %vm1025, %v1100, 0.0
  %v1126 = vsel %vm1026, %v1101, 0.0
  %v1127 = vsel %vm1027, %v1102, 0.0
  %v1128 = vsel %vm1028, %v1103, 0.0
  %v1129 = vsel %vm1029, %v1104, 0.0
  %v1130 = vsel %vm1030, %v1105, 0.0
  %v1131 = vsel %vm1031, %v1106, 0.0
  %v1132 = vsel %vm1032, %v1107, 0.0
  %v1133 = vsel %vm1033, %v1108, 0.0
  %v1134 = vsel %vm1034, %v1109, 0.0
  %v1135 = vsel %vm1035, %v1110, 0.0
  %v1136 = vsel %vm1036, %v1111, 0.0
  %v1137 = vsel %vm1037, %v1112, 0.0
  %v1138 = vsel %vm1038, %v1113, 0.0
  %v1139 = vsel %vm1039, %v1114, 0.0
  %v1140 = vsel %vm1040, %v1115, 0.0
  %v1141 = vsel %vm1041, %v1116, 0.0
  %v1142 = vsel %vm1042, %v1117, 0.0
  %v1143 = vsel %vm1043, %v1118, 0.0
  %v1144 = vsel %vm1044, %v1119, 0.0
  %vm1145 = vcmask 7168
  %v1146 = vsel %vm1145, %v1120, 0.0
  %v1147 = vsel %vm1145, %v1121, 0.0
  %v1148 = vadd.f32 %v1146, %v1147
  %v1149 = vsel %vm1145, %v1122, 0.0
  %v1150 = vadd.f32 %v1148, %v1149
  %v1151 = vsel %vm1145, %v1123, 0.0
  %v1152 = vadd.f32 %v1150, %v1151
  %v1153 = vsel %vm1145, %v1124, 0.0
  %v1154 = vadd.f32 %v1152, %v1153
  %v1155 = vsel %vm1145, %v1125, 0.0
  %v1156 = vadd.f32 %v1154, %v1155
  %v1157 = vsel %vm1145, %v1126, 0.0
  %v1158 = vadd.f32 %v1156, %v1157
  %v1159 = vsel %vm1145, %v1127, 0.0
  %v1160 = vadd.f32 %v1158, %v1159
  %v1161 = vsel %vm1145, %v1128, 0.0
  %v1162 = vadd.f32 %v1160, %v1161
  %v1163 = vsel %vm1145, %v1129, 0.0
  %v1164 = vadd.f32 %v1162, %v1163
  %v1165 = vsel %vm1145, %v1130, 0.0
  %v1166 = vadd.f32 %v1164, %v1165
  %v1167 = vsel %vm1145, %v1131, 0.0
  %v1168 = vadd.f32 %v1166, %v1167
  %v1169 = vsel %vm1145, %v1132, 0.0
  %v1170 = vadd.f32 %v1168, %v1169
  %v1171 = vsel %vm1145, %v1133, 0.0
  %v1172 = vadd.f32 %v1170, %v1171
  %v1173 = vsel %vm1145, %v1134, 0.0
  %v1174 = vadd.f32 %v1172, %v1173
  %v1175 = vsel %vm1145, %v1135, 0.0
  %v1176 = vadd.f32 %v1174, %v1175
  %v1177 = vsel %vm1145, %v1136, 0.0
  %v1178 = vadd.f32 %v1176, %v1177
  %v1179 = vsel %vm1145, %v1137, 0.0
  %v1180 = vadd.f32 %v1178, %v1179
  %v1181 = vsel %vm1145, %v1138, 0.0
  %v1182 = vadd.f32 %v1180, %v1181
  %v1183 = vsel %vm1145, %v1139, 0.0
  %v1184 = vadd.f32 %v1182, %v1183
  %v1185 = vsel %vm1145, %v1140, 0.0
  %v1186 = vadd.f32 %v1184, %v1185
  %v1187 = vsel %vm1145, %v1141, 0.0
  %v1188 = vadd.f32 %v1186, %v1187
  %v1189 = vsel %vm1145, %v1142, 0.0
  %v1190 = vadd.f32 %v1188, %v1189
  %v1191 = vsel %vm1145, %v1143, 0.0
  %v1192 = vadd.f32 %v1190, %v1191
  %v1193 = vsel %vm1145, %v1144, 0.0
  %v1194 = vadd.f32 %v1192, %v1193
  %1195 = vadd.xlane.f32.xlu0 %v1194
  %v1196 = vpop.xlane.xlu0 %1195
  %v1197 = vrot.slane %v1196, 4
  %v1198 = vadd.f32 %v1196, %v1197
  %v1199 = vrot.slane %v1198, 2
  %v1200 = vadd.f32 %v1198, %v1199
  %v1201 = vrot.slane %v1200, 1
  %v1202 = vadd.f32 %v1200, %v1201
  %s1203 = vtos %v1202
  %v1204 = vstv %s1203
  %1205 = vst [vmem:[%s5] sm:$0xff] %v1204
  // Predicated region
  $region18: #{gaussian_dpmm_forward.1} parent=0 // pred_check
    _
  $region19: #{gaussian_dpmm_forward.1} parent=0 // pred_check_branch
    %1207 = sbr.rel (0) target = $region21
  $region20: #{gaussian_dpmm_forward.1} parent=0 // pred_region
    _
  $region21: #{gaussian_dpmm_forward.1} parent=0 // pred_fallthru
    _
  // Predicated region
  $region22: #{gaussian_dpmm_forward.1} parent=0 // pred_check
    _
  $region23: #{gaussian_dpmm_forward.1} parent=0 // pred_check_branch
    %1209 = sbr.rel (0) target = $region25
  $region24: #{gaussian_dpmm_forward.1} parent=0 // pred_region
    _
  $region25: #{gaussian_dpmm_forward.1} parent=0 // pred_fallthru
    _
  // Predicated region
  $region26: #{gaussian_dpmm_forward.1} parent=0 // pred_check
    _
  $region27: #{gaussian_dpmm_forward.1} parent=0 // pred_check_branch
    %1211 = sbr.rel (0) target = $region29
  $region28: #{gaussian_dpmm_forward.1} parent=0 // pred_region
    _
  $region29: #{gaussian_dpmm_forward.1} parent=0 // pred_fallthru
    _
  // Predicated region
  $region30: #{gaussian_dpmm_forward.1} parent=0 // pred_check
    _
  $region31: #{gaussian_dpmm_forward.1} parent=0 // pred_check_branch
    %1213 = sbr.rel (0) target = $region33
  $region32: #{gaussian_dpmm_forward.1} parent=0 // pred_region
    _
  $region33: #{gaussian_dpmm_forward.1} parent=0 // pred_fallthru
    _

</llo_original>
